<compile_context>
chip_gen: v7x
topology: tpu7x:2x2x1
jax: 0.10.0
libtpu: 0.0.40
codegen_flags: <defaults>
</compile_context>

<pallas_src>
import functools

import jax
import jax.numpy as jnp
from jax.experimental import pallas as pl
from jax.experimental.pallas import tpu as pltpu

EMB_DIM = 32
HEAD = 8
NUM_PATCH = int(8 * 8 + 4 * 4 + 2 * 2 + 1)   # 85
POS_DIM = EMB_DIM // HEAD                     # 4
VOCAB = NUM_PATCH + 1                         # 86 embedding rows
MAX_N = VOCAB // 2                            # 43: largest n whose indices stay in range


def _fused_attn_kernel(qk_ref, o_ref, *, n):
    """Whole forward pass on one VMEM-resident fused table.

    qk_ref : (n, 64) f32 — [:, :32] = query_emb(2*arange(n)) * 1/sqrt(pos_dim)
                           [:, 32:] = key_emb(2*arange(n))
    o_ref  : (1, n)  f32 — lane-dense attention output
    """
    q = qk_ref[:, 0:EMB_DIM]                     # (n, 32), scale already folded in
    k = qk_ref[:, EMB_DIM:2 * EMB_DIM]           # (n, 32)

    # Scores, stored transposed: t[j, i] = k_j . (q_i * scale)  (== S[i, j]).
    # dot_general contracts the last dims directly -> no XLU transpose of k.
    t = jax.lax.dot_general(
        k, q,
        dimension_numbers=(((1,), (1,)), ((), ())),
        preferred_element_type=jnp.float32,
    )                                            # (n, n)

    # Row-softmax of S == column (axis-0) softmax of t, numerically stable.
    m = jnp.max(t, axis=0, keepdims=True)        # (1, n)
    e = jnp.exp(t - m)                           # (n, n)
    l = jnp.sum(e, axis=0, keepdims=True)        # (1, n)

    # Value vector v[j] = 2*j (nn.Identity on the int indices), built in-kernel
    # and cast to f32 — the torch original would raise a float@long dtype error.
    v_col = jax.lax.broadcasted_iota(jnp.int32, (n, 1), 0).astype(jnp.float32) * 2.0

    # out[i] = sum_j P[i, j] * v[j]  -> VPU multiply + sublane reduce, (1, n).
    num = jnp.sum(e * v_col, axis=0, keepdims=True)            # (1, n)
    o_ref[...] = num * pl.reciprocal(l, approx=False)          # exact EUP reciprocal


def fused_attention(n, qk_table):
    """qk_table: (n, 64) pre-gathered, pre-scaled, fused q/k table."""
    kernel = functools.partial(_fused_attn_kernel, n=n)
    vmem = pltpu.MemorySpace.VMEM
    return pl.pallas_call(
        kernel,
        out_shape=jax.ShapeDtypeStruct((1, n), jnp.float32),
        in_specs=[pl.BlockSpec(memory_space=vmem)],   # whole fused table in VMEM
        out_specs=pl.BlockSpec(memory_space=vmem),
    )(qk_table)


def prepare_qk_table(query_w, key_w, n):
    """Weight-prep: gather even rows (indices 2*arange(n)), fold in the
    1/sqrt(pos_dim) scale, and fuse both tables into one (n, 64) array.
    In a real model this is computed once per n and cached with the weights."""
    scale = 1.0 / (POS_DIM ** 0.5)
    q_even = query_w[0:2 * n:2, :] * scale        # (n, 32)
    k_even = key_w[0:2 * n:2, :]                  # (n, 32)
    return jnp.concatenate([q_even, k_even], axis=-1)   # (n, 64)


@functools.partial(jax.jit, static_argnames=("n",))
def _forward_impl(query_w, key_w, n):
    qk_table = prepare_qk_table(query_w, key_w, n)
    out = fused_attention(n, qk_table)            # (1, n), lane-dense
    return out[0]                                 # (n,)


def model_forward(x0, query_w, key_w):
    """Mirror of Model.forward.  Only x0.shape[1] matters for the result."""
    n = x0.shape[1]
    # Indices go up to 2*(n-1); the tables have VOCAB=86 rows.  Refuse
    # statically rather than risk an unchecked VMEM OOB read.
    assert 1 <= n <= MAX_N, f"seq len {n} would index past the {VOCAB}-row embedding"
    return _forward_impl(query_w, key_w, n)


if __name__ == "__main__":
    key = jax.random.PRNGKey(0)
    k_q, k_k, k_x = jax.random.split(key, 3)

    # Deterministic "Embedding" weights, N(0, 1) like torch.nn.Embedding init.
    query_w = jax.random.normal(k_q, (VOCAB, EMB_DIM), jnp.float32)
    key_w = jax.random.normal(k_k, (VOCAB, EMB_DIM), jnp.float32)

    # Small input consistent with the module: only x0.shape[1] (seq=8) is used.
    x0 = jax.random.randint(k_x, (2, 8), -8, 8, dtype=jnp.int32)

    out = model_forward(x0, query_w, key_w)
    out = jax.block_until_ready(out)

    # Pure-JAX reference for sanity.
    n = x0.shape[1]
    v5 = 2 * jnp.arange(n)
    q = query_w[v5]
    k = key_w[v5]
    v = v5.astype(jnp.float32)
    s = (q @ k.T) / (POS_DIM ** 0.5)
    p = jax.nn.softmax(s, axis=-1)
    ref = p @ v
    assert out.shape == (n,)
    assert jnp.allclose(out, ref, atol=1e-3, rtol=1e-3), (out, ref)

    print("KERNEL_OK")
</pallas_src>

<mosaic_0001>
module attributes {stable_mosaic.version = 11 : i64} {
  func.func @_fused_attn_kernel(%arg0: memref<8x64xf32, #tpu.memory_space<vmem>>, %arg1: memref<1x8xf32, #tpu.memory_space<vmem>>) attributes {dimension_semantics = [], scalar_prefetch = 0 : i64, scratch_operands = 0 : i64, tpu.core_type = #tpu.core_type<tc>} {
    %c0 = arith.constant 0 : index
    %c0_0 = arith.constant 0 : index
    %0 = vector.load %arg0[%c0, %c0_0] : memref<8x64xf32, #tpu.memory_space<vmem>>, vector<8x32xf32>
    %c0_1 = arith.constant 0 : index
    %c32 = arith.constant 32 : index
    %1 = vector.load %arg0[%c0_1, %c32] : memref<8x64xf32, #tpu.memory_space<vmem>>, vector<8x32xf32>
    %cst = arith.constant dense<0.000000e+00> : vector<8x8xf32>
    %2 = tpu.matmul %1, %0, %cst {dimension_numbers = #tpu.dot_dimension_numbers<[1], [1], [0], [0], [0, 0, 1, 0], [], []>} : vector<8x32xf32>, vector<8x32xf32>, vector<8x8xf32> -> vector<8x8xf32>
    %cst_2 = arith.constant dense<0xFF800000> : vector<8xf32>
    %3 = vector.multi_reduction <maximumf>, %2, %cst_2 [0] : vector<8x8xf32> to vector<8xf32>
    %4 = vector.shape_cast %3 : vector<8xf32> to vector<1x8xf32>
    %5 = vector.broadcast %4 : vector<1x8xf32> to vector<8x8xf32>
    %6 = arith.subf %2, %5 : vector<8x8xf32>
    %7 = math.exp %6 : vector<8x8xf32>
    %cst_3 = arith.constant dense<0.000000e+00> : vector<8xf32>
    %8 = vector.multi_reduction <add>, %7, %cst_3 [0] : vector<8x8xf32> to vector<8xf32>
    %9 = vector.shape_cast %8 : vector<8xf32> to vector<1x8xf32>
    %10 = tpu.iota {dimensions = array<i32: 0>} : vector<8x1xi32>
    %11 = arith.sitofp %10 : vector<8x1xi32> to vector<8x1xf32>
    %cst_4 = arith.constant 2.000000e+00 : f32
    %12 = vector.broadcast %cst_4 : f32 to vector<8x1xf32>
    %13 = arith.mulf %11, %12 : vector<8x1xf32>
    %14 = vector.broadcast %13 : vector<8x1xf32> to vector<8x8xf32>
    %15 = arith.mulf %7, %14 : vector<8x8xf32>
    %cst_5 = arith.constant dense<0.000000e+00> : vector<8xf32>
    %16 = vector.multi_reduction <add>, %15, %cst_5 [0] : vector<8x8xf32> to vector<8xf32>
    %17 = vector.shape_cast %16 : vector<8xf32> to vector<1x8xf32>
    %18 = tpu.reciprocal %9 : vector<1x8xf32> -> vector<1x8xf32>
    %19 = arith.mulf %17, %18 : vector<1x8xf32>
    %c0_6 = arith.constant 0 : index
    %c0_7 = arith.constant 0 : index
    %20 = vector.load %arg1[%c0_6, %c0_7] : memref<1x8xf32, #tpu.memory_space<vmem>>, vector<1x8xf32>
    tpu.vector_store %arg1[%c0_6, %c0_7], %19 {strides = array<i32>} : memref<1x8xf32, #tpu.memory_space<vmem>>, vector<1x8xf32>,
    return
  }
}

</mosaic_0001>

<llo_original>
// kernel: _forward_impl.1
$region0: #{_forward_impl.1}
  #allocation0 [shape = 'u32[]', space=smem, size = 0x4, offset = 0x4, fixed_abs, tag = 'smem constant byte address 0x4 - core index']
  #allocation1 [shape = 'u32[144,128]{1,0:T(1,128)}', space=vmem, size = 0x12000, scoped, tag = 'internal scratch']
  %s0 = inlined_call_operand.vmem [shape: f32[8,64], index: 0, kind: input, shape index: {}]
  %s1 = inlined_call_operand.hbm [shape: f32[1,8], index: 1, kind: output, shape index: {}]
  %s2 = sld [smem:[#allocation0]]
  $region14: #{_forward_impl.1} parent=0
    _
  %s4 = ssub.s32 1, %s2
  %s5 = scalar_select 0, %s4, %s2
  $region1: #{_forward_impl.1} parent=0
    #allocation2 [shape = 'u8[512]{0}', space=vmem, size = 0x400, scoped, tag = 'output window, operand 0, single buffered']
    #allocation3 [shape = 's32[1]{0}', space=sflag, size = 0x4, scoped, tag = 'scoped memory for _forward_impl.1']
    %6 = vsyncpa [#allocation3], 0
    // Predicated region
    $region2: #{_forward_impl.1} parent=1 // pred_check
      _
    $region3: #{_forward_impl.1} parent=1 // pred_check_branch
      %8 = sbr.rel (0) target = $region5
    $region4: #{_forward_impl.1} parent=1 // pred_region
      _
    $region5: #{_forward_impl.1} parent=1 // pred_fallthru
      _
    %v9 = vld [vmem:[%s0] sm:$0xff]
    %11 = vrot.lane.b32.xlu0 %v9, 96
    %v12 = vpop.permute.xlu0 %11
    %vm13 = vcmask 261120
    %v14 = vsel %vm13, %v12, 0
    %v16 = vsel %vm13, %v9, 0
    %18 = vmatprep.subr.mxu0 0.0
    %19 = vmatpush1.xpose.msra.mxu0 %v16
    %20 = vmatprep.subr.mxu0 0.0
    %21 = vmatpush1.xpose.msra.mxu0 0.0
    %22 = vmatprep.subr.mxu0 0.0
    %23 = vmatpush1.xpose.msra.mxu0 0.0
    %24 = vmatprep.subr.mxu0 0.0
    %25 = vmatpush1.xpose.msra.mxu0 0.0
    %26 = vmatprep.subr.mxu0 0.0
    %27 = vmatpush1.xpose.msra.mxu0 0.0
    %28 = vmatprep.subr.mxu0 0.0
    %29 = vmatpush1.xpose.msra.mxu0 0.0
    %30 = vmatprep.subr.mxu0 0.0
    %31 = vmatpush1.xpose.msra.mxu0 0.0
    %32 = vmatprep.subr.mxu0 0.0
    %33 = vmatpush1.xpose.msra.mxu0 0.0
    %34 = vmatprep.subr.mxu0 0.0
    %35 = vmatpush1.xpose.msra.mxu0 0.0
    %36 = vmatprep.subr.mxu0 0.0
    %37 = vmatpush1.xpose.msra.mxu0 0.0
    %38 = vmatprep.subr.mxu0 0.0
    %39 = vmatpush1.xpose.msra.mxu0 0.0
    %40 = vmatprep.subr.mxu0 0.0
    %41 = vmatpush1.xpose.msra.mxu0 0.0
    %42 = vmatprep.subr.mxu0 0.0
    %43 = vmatpush1.xpose.msra.mxu0 0.0
    %44 = vmatprep.subr.mxu0 0.0
    %45 = vmatpush1.xpose.msra.mxu0 0.0
    %46 = vmatprep.subr.mxu0 0.0
    %47 = vmatpush1.xpose.msra.mxu0 0.0
    %48 = vmatprep.subr.mxu0 0.0
    %49 = vmatpush1.xpose.msra.mxu0 0.0
    %50 = vmatprep.subr.mxu0 0.0
    %51 = vmatpush1.xpose.msra.mxu0 0.0
    %52 = vmatprep.subr.mxu0 0.0
    %53 = vmatpush1.xpose.msra.mxu0 0.0
    %54 = vmatprep.subr.mxu0 0.0
    %55 = vmatpush1.xpose.msra.mxu0 0.0
    %56 = vmatprep.subr.mxu0 0.0
    %57 = vmatpush1.xpose.msra.mxu0 0.0
    %58 = vmatprep.subr.mxu0 0.0
    %59 = vmatpush1.xpose.msra.mxu0 0.0
    %60 = vmatprep.subr.mxu0 0.0
    %61 = vmatpush1.xpose.msra.mxu0 0.0
    %62 = vmatprep.subr.mxu0 0.0
    %63 = vmatpush1.xpose.msra.mxu0 0.0
    %64 = vmatprep.subr.mxu0 0.0
    %65 = vmatpush1.xpose.msra.mxu0 0.0
    %66 = vmatprep.subr.mxu0 0.0
    %67 = vmatpush1.xpose.msra.mxu0 0.0
    %68 = vmatprep.subr.mxu0 0.0
    %69 = vmatpush1.xpose.msra.mxu0 0.0
    %70 = vmatprep.subr.mxu0 0.0
    %71 = vmatpush1.xpose.msra.mxu0 0.0
    %72 = vmatprep.subr.mxu0 0.0
    %73 = vmatpush1.xpose.msra.mxu0 0.0
    %74 = vmatprep.subr.mxu0 0.0
    %75 = vmatpush1.xpose.msra.mxu0 0.0
    %76 = vmatprep.subr.mxu0 0.0
    %77 = vmatpush1.xpose.msra.mxu0 0.0
    %78 = vmatprep.subr.mxu0 0.0
    %79 = vmatpush1.xpose.msra.mxu0 0.0
    %80 = vmatprep.subr.mxu0 0.0
    %81 = vmatpush1.xpose.msra.mxu0 0.0
    %82 = vmatprep.mubr.f32.mxu0 0.0
    %83 = vmatmul.mubr.f32.gmra.mrb[0].mxu0 %v14
    %v84 = vpop.f32.mrb[0].mxu0
    %v85 = vadd.f32 0.0, %v84
    %v86 = vpop.f32.mrb[0].mxu0
    %87 = vdwg.mxu0
    %vm88 = vcmask 64512
    %v89 = vsel %vm88, %v85, -inf
    %v90 = vrot.slane %v89, 4
    %v91 = vmax.f32 %v89, %v90
    %v92 = vrot.slane %v91, 2
    %v93 = vmax.f32 %v91, %v92
    %v94 = vrot.slane %v93, 1
    %v95 = vmax.f32 %v93, %v94
    %v96 = vsub.f32 %v85, %v95
    %v97 = vmul.f32 %v96, 1.442695
    %v98 = vpow.pop %v97
    %v99 = vsel %vm88, %v98, 0.0
    %v100 = vrot.slane %v99, 4
    %v101 = vadd.f32 %v99, %v100
    %v102 = vrot.slane %v101, 2
    %v103 = vadd.f32 %v101, %v102
    %v104 = vrot.slane %v103, 1
    %v105 = vadd.f32 %v103, %v104
    %v106 = vlaneseq
    %v107 = vshrl.u32 %v106, 7
    %v108 = vcvt.s32.f32 %v107
    %v109 = vmul.f32 %v108, 2.0
    %v110 = vmul.f32 %v98, %v109
    %v111 = vsel %vm88, %v110, 0.0
    %v112 = vrot.slane %v111, 4
    %v113 = vadd.f32 %v111, %v112
    %v114 = vrot.slane %v113, 2
    %v115 = vadd.f32 %v113, %v114
    %v116 = vrot.slane %v115, 1
    %v117 = vadd.f32 %v115, %v116
    %v118 = vrcp.pop %v105
    %v119 = vmul.f32 %v117, %v118
    %vm120 = vcmask 57344
    %121 = vst.msk [vmem:[#allocation2] sm:$0x1] %vm120, %v119
    // Predicated region
    $region6: #{_forward_impl.1} parent=1 // pred_check
      _
    $region7: #{_forward_impl.1} parent=1 // pred_check_branch
      %123 = sbr.rel (0) target = $region9
    $region8: #{_forward_impl.1} parent=1 // pred_region
      %s125 = ssub.s32 16, 16
      %126 = vsyncadd [#allocation3], %s125
      %s128 = sshll.u32 [#allocation2], 4
      %s129 = int_to_ptr.vmem [resolvable:$true] %s128
      %131 = dma.vmem_to_hbm [thread:$0]  %s129, 16, %s1, [#allocation3]
    $region9: #{_forward_impl.1} parent=1 // pred_fallthru
      _
    // Predicated region
    $region10: #{_forward_impl.1} parent=1 // pred_check
      _
    $region11: #{_forward_impl.1} parent=1 // pred_check_branch
      %133 = sbr.rel (0) target = $region13
    $region12: #{_forward_impl.1} parent=1 // pred_region
      %134 = dma.done [#allocation3], 16
    $region13: #{_forward_impl.1} parent=1 // pred_fallthru
      _
    %135 = vsyncpa [#allocation3], 1

</llo_original>
